<compile_context>
chip_gen: v5e
topology: v5e:2x2
jax: 0.10.0
libtpu: 0.0.40
codegen_flags: <defaults>
</compile_context>

<pallas_src>
import functools

import jax
import jax.numpy as jnp
from jax.experimental import pallas as pl
from jax.experimental.pallas import tpu as pltpu


def _layernorm(x, gamma, beta, eps=1e-5):
    # Fused single-pass statistics: var = E[x^2] - mu^2 (clamped), one fewer
    # full-width pass / cross-lane reduction than the two-pass form.
    n = x.shape[-1]
    inv_n = 1.0 / float(n)
    s1 = jnp.sum(x, axis=-1, keepdims=True)
    s2 = jnp.sum(x * x, axis=-1, keepdims=True)
    mu = s1 * inv_n
    var = jnp.maximum(s2 * inv_n - mu * mu, 0.0)
    return (x - mu) * jax.lax.rsqrt(var + eps) * gamma + beta


def _predictor_kernel(merged_w3, *refs):
    # Unpack positionally at trace time depending on the w3 layout.
    if merged_w3:
        (state_ref, action_ref,
         w1_ref, b1_ref, w2_ref,
         w3_ref, w4_ref, w5_ref,
         pvh_ref, pv2h_ref, out_ref) = refs
    else:
        (state_ref, action_ref,
         w1_ref, b1_ref, w2_ref,
         w3s_ref, w3a_ref, w4_ref, w5_ref,
         pvh_ref, pv2h_ref, out_ref) = refs

    act = action_ref[...].astype(jnp.float32)            # [TB, A]
    A = act.shape[-1]

    # ---- action_proj layer 1: rank-A VPU broadcast-FMA (skip K=A matmul) ----
    a = b1_ref[...]                                       # [1, Hp] f32 (padded)
    for j in range(A):                                    # static unroll, A=2
        a = a + act[:, j:j + 1] * w1_ref[j:j + 1, :]      # [TB, Hp]
    a = jnp.maximum(a, 0.0)

    # ---- action_proj layer 2 + LayerNorm (bf16 MXU, f32 accumulate) ----
    a = jnp.dot(a.astype(jnp.bfloat16), w2_ref[...],
                preferred_element_type=jnp.float32) + pvh_ref[0:1, :]
    a = _layernorm(a, pvh_ref[1:2, :], pvh_ref[2:3, :])   # [TB, H] f32

    s_bf = state_ref[...].astype(jnp.bfloat16)            # no-op when streamed bf16

    # ---- net layer 1: cat([state, a]) @ W3 ----
    if merged_w3:
        # Lane-adjacent concat -> single K=2H matmul (fills 256-wide MXU).
        x_in = jnp.concatenate([s_bf, a.astype(jnp.bfloat16)], axis=-1)
        x = jnp.dot(x_in, w3_ref[...], preferred_element_type=jnp.float32)
    else:
        # v5e path: two K=H dots, no concatenated intermediate.
        x = (jnp.dot(s_bf, w3s_ref[...], preferred_element_type=jnp.float32)
             + jnp.dot(a.astype(jnp.bfloat16), w3a_ref[...],
                       preferred_element_type=jnp.float32))
    x = jnp.maximum(x + pv2h_ref[0:1, :], 0.0)
    x = _layernorm(x, pv2h_ref[1:2, :], pv2h_ref[2:3, :])  # [TB, 2H]

    # ---- net layer 2 ----
    x = jnp.dot(x.astype(jnp.bfloat16), w4_ref[...],
                preferred_element_type=jnp.float32) + pvh_ref[3:4, :]
    x = jnp.maximum(x, 0.0)
    x = _layernorm(x, pvh_ref[4:5, :], pvh_ref[5:6, :])    # [TB, H]

    # ---- net layer 3 ----
    x = jnp.dot(x.astype(jnp.bfloat16), w5_ref[...],
                preferred_element_type=jnp.float32) + pvh_ref[6:7, :]
    x = _layernorm(x, pvh_ref[7:8, :], pvh_ref[8:9, :])    # [TB, H]

    out_ref[...] = x.astype(out_ref.dtype)


def prepare_params(params, hidden_dim, *, merged_w3=True):
    """One-time weight prep (call once, reuse the result every forward):
    bf16 cast of MXU operands, 128-lane pad of the H/2 intermediate, packing
    of the 15 tiny bias/gamma/beta vectors into two slabs, and optional w3
    state/action split (merged_w3=False is the v5e layout)."""
    (w1, b1, w2, b2, ga, ba,
     w3, b3, g1, be1,
     w4, b4, g2, be2,
     w5, b5, g3, be3) = params
    H = hidden_dim
    Hh = w1.shape[1]                      # H // 2
    pad = (-Hh) % 128                     # pad intermediate width to 128 lanes

    w1p = jnp.pad(w1, ((0, 0), (0, pad))).astype(jnp.float32)        # [A, Hp] (VPU)
    b1p = jnp.pad(jnp.asarray(b1, jnp.float32).reshape(1, -1),
                  ((0, 0), (0, pad)))                                 # [1, Hp]
    w2p = jnp.pad(w2, ((0, pad), (0, 0))).astype(jnp.bfloat16)        # [Hp, H]
    w4b = w4.astype(jnp.bfloat16)                                     # [2H, H]
    w5b = w5.astype(jnp.bfloat16)                                     # [H, H]

    def row(v):
        return jnp.asarray(v, jnp.float32).reshape(1, -1)

    # Packed width-H vectors: b2, ga, ba, b4, g2, be2, b5, g3, be3
    pvh = jnp.concatenate([row(b2), row(ga), row(ba),
                           row(b4), row(g2), row(be2),
                           row(b5), row(g3), row(be3)], axis=0)       # [9, H]
    # Packed width-2H vectors: b3, g1, be1
    pv2h = jnp.concatenate([row(b3), row(g1), row(be1)], axis=0)      # [3, 2H]

    if merged_w3:
        w3p = (w3.astype(jnp.bfloat16),)                              # [2H, 2H]
    else:
        w3p = (w3[:H, :].astype(jnp.bfloat16),                        # [H, 2H]
               w3[H:, :].astype(jnp.bfloat16))                        # [H, 2H]

    return (w1p, b1p, w2p) + w3p + (w4b, w5b, pvh, pv2h)


def _choose_tile(B):
    """Largest tile giving >=4 grid steps (>=2 per TC on v7x megacore),
    else >=2 steps, else a single full-batch step."""
    if B <= 8:
        return B
    for min_steps in (4, 2):
        for cand in (1024, 512, 256, 128, 64, 32, 16, 8):
            if pl.cdiv(B, cand) >= min_steps:
                return cand
    return B


def predictor_forward(state, action, prep, *, batch_tile=None,
                      out_dtype=jnp.bfloat16, stream_bf16=True):
    B, H = state.shape
    A = action.shape[-1]
    merged_w3 = (len(prep) == 8)          # 8 arrays => merged w3, 9 => split

    if stream_bf16:
        # Halve the dominant HBM read traffic; state only feeds a bf16 matmul.
        state = state.astype(jnp.bfloat16)

    TB = _choose_tile(B) if batch_tile is None else batch_tile
    Bp = pl.cdiv(B, TB) * TB
    if Bp != B:
        # Pad instead of silently degrading to a single un-pipelined step.
        state = jnp.pad(state, ((0, Bp - B), (0, 0)))
        action = jnp.pad(action, ((0, Bp - B), (0, 0)))

    def row_spec(cols):
        return pl.BlockSpec((TB, cols), lambda i: (i, 0))

    def full_spec(shape):
        return pl.BlockSpec(shape, lambda i: tuple(0 for _ in shape))

    param_specs = [full_spec(p.shape) for p in prep]

    out = pl.pallas_call(
        functools.partial(_predictor_kernel, merged_w3),
        out_shape=jax.ShapeDtypeStruct((Bp, H), out_dtype),
        grid=(Bp // TB,),
        in_specs=[row_spec(H), row_spec(A)] + param_specs,
        out_specs=row_spec(H),
        compiler_params=pltpu.CompilerParams(
            dimension_semantics=("parallel",)),
    )(state, action, *prep)
    return out[:B] if Bp != B else out


def predictor_reference(state, action, params, *, bf16_matmuls=False):
    """Pure-JAX reference.  With bf16_matmuls=True it mirrors the kernel's
    precision choices (first action layer f32, MXU matmuls bf16-in /
    f32-accumulate, LN/ReLU in f32)."""
    mdt = jnp.bfloat16 if bf16_matmuls else jnp.float32

    def mm(x, w):
        return jnp.dot(x.astype(mdt), w.astype(mdt),
                       preferred_element_type=jnp.float32)

    (w1, b1, w2, b2, ga, ba,
     w3, b3, g1, be1,
     w4, b4, g2, be2,
     w5, b5, g3, be3) = params
    a = jnp.maximum(action @ w1 + b1, 0.0)
    a = _layernorm(mm(a, w2) + b2, ga, ba)
    x = jnp.concatenate([state, a], axis=1)
    x = _layernorm(jnp.maximum(mm(x, w3) + b3, 0.0), g1, be1)
    x = _layernorm(jnp.maximum(mm(x, w4) + b4, 0.0), g2, be2)
    x = _layernorm(mm(x, w5) + b5, g3, be3)
    return x


def init_params(key, hidden_dim=128, action_dim=2):
    H, A = hidden_dim, action_dim
    keys = jax.random.split(key, 5)

    def lin(k, fan_in, fan_out):
        scale = 1.0 / jnp.sqrt(jnp.float32(fan_in))
        w = jax.random.uniform(k, (fan_in, fan_out), jnp.float32, -scale, scale)
        b = jnp.zeros((1, fan_out), jnp.float32)
        return w, b

    w1, b1 = lin(keys[0], A, H // 2)
    w2, b2 = lin(keys[1], H // 2, H)
    ga, ba = jnp.ones((1, H), jnp.float32), jnp.zeros((1, H), jnp.float32)

    w3, b3 = lin(keys[2], 2 * H, 2 * H)
    g1, be1 = jnp.ones((1, 2 * H), jnp.float32), jnp.zeros((1, 2 * H), jnp.float32)
    w4, b4 = lin(keys[3], 2 * H, H)
    g2, be2 = jnp.ones((1, H), jnp.float32), jnp.zeros((1, H), jnp.float32)
    w5, b5 = lin(keys[4], H, H)
    g3, be3 = jnp.ones((1, H), jnp.float32), jnp.zeros((1, H), jnp.float32)

    return (w1, b1, w2, b2, ga, ba,
            w3, b3, g1, be1,
            w4, b4, g2, be2,
            w5, b5, g3, be3)


if __name__ == "__main__":
    hidden_dim, action_dim, batch = 128, 2, 8
    key = jax.random.PRNGKey(0)
    k_s, k_a, k_p = jax.random.split(key, 3)

    state = jax.random.normal(k_s, (batch, hidden_dim), jnp.float32)
    action = jax.random.normal(k_a, (batch, action_dim), jnp.float32)
    params = init_params(k_p, hidden_dim, action_dim)

    # One-time weight prep (hoisted out of the per-call path).
    prep = prepare_params(params, hidden_dim, merged_w3=True)

    out = predictor_forward(state, action, prep)
    out = jax.block_until_ready(out)

    ref_bf16 = jax.block_until_ready(
        predictor_reference(state, action, params, bf16_matmuls=True))
    ref_f32 = jax.block_until_ready(
        predictor_reference(state, action, params, bf16_matmuls=False))

    assert out.shape == (batch, hidden_dim)
    out_f32 = out.astype(jnp.float32)
    # Tight check against the precision-matched reference, quantized to the
    # kernel's bf16 output dtype; loose sanity check against full f32.
    ref_bf16_q = ref_bf16.astype(out.dtype).astype(jnp.float32)
    err_tight = float(jnp.max(jnp.abs(out_f32 - ref_bf16_q)))
    err_f32 = float(jnp.max(jnp.abs(out_f32 - ref_f32)))
    assert jnp.allclose(out_f32, ref_bf16_q, atol=1e-2, rtol=1e-2), (err_tight, err_f32)
    assert jnp.allclose(out_f32, ref_f32, atol=1e-1, rtol=1e-1), (err_tight, err_f32)

    print("KERNEL_OK")
</pallas_src>

<mosaic_0001>
module attributes {stable_mosaic.version = 11 : i64} {
  func.func @_predictor_kernel(%arg0: i32, %arg1: memref<8x128xbf16, #tpu.memory_space<vmem>>, %arg2: memref<8x2xf32, #tpu.memory_space<vmem>>, %arg3: memref<2x128xf32, #tpu.memory_space<vmem>>, %arg4: memref<1x128xf32, #tpu.memory_space<vmem>>, %arg5: memref<128x128xbf16, #tpu.memory_space<vmem>>, %arg6: memref<256x256xbf16, #tpu.memory_space<vmem>>, %arg7: memref<256x128xbf16, #tpu.memory_space<vmem>>, %arg8: memref<128x128xbf16, #tpu.memory_space<vmem>>, %arg9: memref<9x128xf32, #tpu.memory_space<vmem>>, %arg10: memref<3x256xf32, #tpu.memory_space<vmem>>, %arg11: memref<8x128xbf16, #tpu.memory_space<vmem>>) attributes {dimension_semantics = [#tpu.dimension_semantics<parallel>], iteration_bounds = array<i64: 1>, scalar_prefetch = 0 : i64, scratch_operands = 0 : i64, tpu.core_type = #tpu.core_type<tc>, window_params = [{transform_indices = @transform_0, window_bounds = array<i64: 8, 128>}, {transform_indices = @transform_1, window_bounds = array<i64: 8, 2>}, {pipeline_mode = #tpu.pipeline_mode<synchronous>, transform_indices = @transform_2, window_bounds = array<i64: 2, 128>}, {pipeline_mode = #tpu.pipeline_mode<synchronous>, transform_indices = @transform_3, window_bounds = array<i64: 1, 128>}, {pipeline_mode = #tpu.pipeline_mode<synchronous>, transform_indices = @transform_4, window_bounds = array<i64: 128, 128>}, {pipeline_mode = #tpu.pipeline_mode<synchronous>, transform_indices = @transform_5, window_bounds = array<i64: 256, 256>}, {pipeline_mode = #tpu.pipeline_mode<synchronous>, transform_indices = @transform_6, window_bounds = array<i64: 256, 128>}, {pipeline_mode = #tpu.pipeline_mode<synchronous>, transform_indices = @transform_7, window_bounds = array<i64: 128, 128>}, {pipeline_mode = #tpu.pipeline_mode<synchronous>, transform_indices = @transform_8, window_bounds = array<i64: 9, 128>}, {pipeline_mode = #tpu.pipeline_mode<synchronous>, transform_indices = @transform_9, window_bounds = array<i64: 3, 256>}, {transform_indices = @transform_10, window_bounds = array<i64: 8, 128>}]} {
    %c0 = arith.constant 0 : index
    %c0_0 = arith.constant 0 : index
    %0 = vector.load %arg2[%c0, %c0_0] : memref<8x2xf32, #tpu.memory_space<vmem>>, vector<8x2xf32>
    %c0_1 = arith.constant 0 : index
    %c0_2 = arith.constant 0 : index
    %1 = vector.load %arg4[%c0_1, %c0_2] : memref<1x128xf32, #tpu.memory_space<vmem>>, vector<1x128xf32>
    %2 = vector.extract_strided_slice %0 {offsets = [0, 0], sizes = [8, 1], strides = [1, 1]} : vector<8x2xf32> to vector<8x1xf32>
    %c0_3 = arith.constant 0 : index
    %c0_4 = arith.constant 0 : index
    %3 = vector.load %arg3[%c0_3, %c0_4] : memref<2x128xf32, #tpu.memory_space<vmem>>, vector<1x128xf32>
    %4 = vector.broadcast %2 : vector<8x1xf32> to vector<8x128xf32>
    %5 = vector.broadcast %3 : vector<1x128xf32> to vector<8x128xf32>
    %6 = arith.mulf %4, %5 : vector<8x128xf32>
    %7 = vector.broadcast %1 : vector<1x128xf32> to vector<8x128xf32>
    %8 = arith.addf %7, %6 : vector<8x128xf32>
    %9 = vector.extract_strided_slice %0 {offsets = [0, 1], sizes = [8, 1], strides = [1, 1]} : vector<8x2xf32> to vector<8x1xf32>
    %c1 = arith.constant 1 : index
    %c0_5 = arith.constant 0 : index
    %10 = vector.load %arg3[%c1, %c0_5] : memref<2x128xf32, #tpu.memory_space<vmem>>, vector<1x128xf32>
    %11 = vector.broadcast %9 : vector<8x1xf32> to vector<8x128xf32>
    %12 = vector.broadcast %10 : vector<1x128xf32> to vector<8x128xf32>
    %13 = arith.mulf %11, %12 : vector<8x128xf32>
    %14 = arith.addf %8, %13 : vector<8x128xf32>
    %cst = arith.constant 0.000000e+00 : f32
    %15 = vector.broadcast %cst : f32 to vector<8x128xf32>
    %16 = arith.maximumf %14, %15 : vector<8x128xf32>
    %17 = arith.truncf %16 : vector<8x128xf32> to vector<8x128xbf16>
    %c0_6 = arith.constant 0 : index
    %c0_7 = arith.constant 0 : index
    %18 = vector.load %arg5[%c0_6, %c0_7] : memref<128x128xbf16, #tpu.memory_space<vmem>>, vector<128x128xbf16>
    %cst_8 = arith.constant dense<0.000000e+00> : vector<8x128xf32>
    %19 = tpu.matmul %17, %18, %cst_8 {dimension_numbers = #tpu.dot_dimension_numbers<[1], [0], [0], [1], [0, 0, 1, 1], [], []>} : vector<8x128xbf16>, vector<128x128xbf16>, vector<8x128xf32> -> vector<8x128xf32>
    %c0_9 = arith.constant 0 : index
    %c0_10 = arith.constant 0 : index
    %20 = vector.load %arg9[%c0_9, %c0_10] : memref<9x128xf32, #tpu.memory_space<vmem>>, vector<1x128xf32>
    %21 = vector.broadcast %20 : vector<1x128xf32> to vector<8x128xf32>
    %22 = arith.addf %19, %21 : vector<8x128xf32>
    %c1_11 = arith.constant 1 : index
    %c0_12 = arith.constant 0 : index
    %23 = vector.load %arg9[%c1_11, %c0_12] : memref<9x128xf32, #tpu.memory_space<vmem>>, vector<1x128xf32>
    %c2 = arith.constant 2 : index
    %c0_13 = arith.constant 0 : index
    %24 = vector.load %arg9[%c2, %c0_13] : memref<9x128xf32, #tpu.memory_space<vmem>>, vector<1x128xf32>
    %cst_14 = arith.constant dense<0.000000e+00> : vector<8xf32>
    %25 = vector.multi_reduction <add>, %22, %cst_14 [1] : vector<8x128xf32> to vector<8xf32>
    %26 = vector.shape_cast %25 : vector<8xf32> to vector<8x1xf32>
    %27 = arith.mulf %22, %22 : vector<8x128xf32>
    %cst_15 = arith.constant dense<0.000000e+00> : vector<8xf32>
    %28 = vector.multi_reduction <add>, %27, %cst_15 [1] : vector<8x128xf32> to vector<8xf32>
    %29 = vector.shape_cast %28 : vector<8xf32> to vector<8x1xf32>
    %cst_16 = arith.constant 7.812500e-03 : f32
    %30 = vector.broadcast %cst_16 : f32 to vector<8x1xf32>
    %31 = arith.mulf %26, %30 : vector<8x1xf32>
    %cst_17 = arith.constant 7.812500e-03 : f32
    %32 = vector.broadcast %cst_17 : f32 to vector<8x1xf32>
    %33 = arith.mulf %29, %32 : vector<8x1xf32>
    %34 = arith.mulf %31, %31 : vector<8x1xf32>
    %35 = arith.subf %33, %34 : vector<8x1xf32>
    %cst_18 = arith.constant 0.000000e+00 : f32
    %36 = vector.broadcast %cst_18 : f32 to vector<8x1xf32>
    %37 = arith.maximumf %35, %36 : vector<8x1xf32>
    %38 = vector.broadcast %31 : vector<8x1xf32> to vector<8x128xf32>
    %39 = arith.subf %22, %38 : vector<8x128xf32>
    %cst_19 = arith.constant 9.99999974E-6 : f32
    %40 = vector.broadcast %cst_19 : f32 to vector<8x1xf32>
    %41 = arith.addf %37, %40 : vector<8x1xf32>
    %42 = math.rsqrt %41 : vector<8x1xf32>
    %43 = vector.broadcast %42 : vector<8x1xf32> to vector<8x128xf32>
    %44 = arith.mulf %39, %43 : vector<8x128xf32>
    %45 = vector.broadcast %23 : vector<1x128xf32> to vector<8x128xf32>
    %46 = arith.mulf %44, %45 : vector<8x128xf32>
    %47 = vector.broadcast %24 : vector<1x128xf32> to vector<8x128xf32>
    %48 = arith.addf %46, %47 : vector<8x128xf32>
    %c0_20 = arith.constant 0 : index
    %c0_21 = arith.constant 0 : index
    %49 = vector.load %arg1[%c0_20, %c0_21] : memref<8x128xbf16, #tpu.memory_space<vmem>>, vector<8x128xbf16>
    %50 = arith.truncf %48 : vector<8x128xf32> to vector<8x128xbf16>
    %51 = tpu.concatenate %49, %50 in 1 : vector<8x128xbf16>, vector<8x128xbf16> -> vector<8x256xbf16>
    %c0_22 = arith.constant 0 : index
    %c0_23 = arith.constant 0 : index
    %52 = vector.load %arg6[%c0_22, %c0_23] : memref<256x256xbf16, #tpu.memory_space<vmem>>, vector<256x256xbf16>
    %cst_24 = arith.constant dense<0.000000e+00> : vector<8x256xf32>
    %53 = tpu.matmul %51, %52, %cst_24 {dimension_numbers = #tpu.dot_dimension_numbers<[1], [0], [0], [1], [0, 0, 1, 1], [], []>} : vector<8x256xbf16>, vector<256x256xbf16>, vector<8x256xf32> -> vector<8x256xf32>
    %c0_25 = arith.constant 0 : index
    %c0_26 = arith.constant 0 : index
    %54 = vector.load %arg10[%c0_25, %c0_26] : memref<3x256xf32, #tpu.memory_space<vmem>>, vector<1x256xf32>
    %55 = vector.broadcast %54 : vector<1x256xf32> to vector<8x256xf32>
    %56 = arith.addf %53, %55 : vector<8x256xf32>
    %cst_27 = arith.constant 0.000000e+00 : f32
    %57 = vector.broadcast %cst_27 : f32 to vector<8x256xf32>
    %58 = arith.maximumf %56, %57 : vector<8x256xf32>
    %c1_28 = arith.constant 1 : index
    %c0_29 = arith.constant 0 : index
    %59 = vector.load %arg10[%c1_28, %c0_29] : memref<3x256xf32, #tpu.memory_space<vmem>>, vector<1x256xf32>
    %c2_30 = arith.constant 2 : index
    %c0_31 = arith.constant 0 : index
    %60 = vector.load %arg10[%c2_30, %c0_31] : memref<3x256xf32, #tpu.memory_space<vmem>>, vector<1x256xf32>
    %cst_32 = arith.constant dense<0.000000e+00> : vector<8xf32>
    %61 = vector.multi_reduction <add>, %58, %cst_32 [1] : vector<8x256xf32> to vector<8xf32>
    %62 = vector.shape_cast %61 : vector<8xf32> to vector<8x1xf32>
    %63 = arith.mulf %58, %58 : vector<8x256xf32>
    %cst_33 = arith.constant dense<0.000000e+00> : vector<8xf32>
    %64 = vector.multi_reduction <add>, %63, %cst_33 [1] : vector<8x256xf32> to vector<8xf32>
    %65 = vector.shape_cast %64 : vector<8xf32> to vector<8x1xf32>
    %cst_34 = arith.constant 3.906250e-03 : f32
    %66 = vector.broadcast %cst_34 : f32 to vector<8x1xf32>
    %67 = arith.mulf %62, %66 : vector<8x1xf32>
    %cst_35 = arith.constant 3.906250e-03 : f32
    %68 = vector.broadcast %cst_35 : f32 to vector<8x1xf32>
    %69 = arith.mulf %65, %68 : vector<8x1xf32>
    %70 = arith.mulf %67, %67 : vector<8x1xf32>
    %71 = arith.subf %69, %70 : vector<8x1xf32>
    %cst_36 = arith.constant 0.000000e+00 : f32
    %72 = vector.broadcast %cst_36 : f32 to vector<8x1xf32>
    %73 = arith.maximumf %71, %72 : vector<8x1xf32>
    %74 = vector.broadcast %67 : vector<8x1xf32> to vector<8x256xf32>
    %75 = arith.subf %58, %74 : vector<8x256xf32>
    %cst_37 = arith.constant 9.99999974E-6 : f32
    %76 = vector.broadcast %cst_37 : f32 to vector<8x1xf32>
    %77 = arith.addf %73, %76 : vector<8x1xf32>
    %78 = math.rsqrt %77 : vector<8x1xf32>
    %79 = vector.broadcast %78 : vector<8x1xf32> to vector<8x256xf32>
    %80 = arith.mulf %75, %79 : vector<8x256xf32>
    %81 = vector.broadcast %59 : vector<1x256xf32> to vector<8x256xf32>
    %82 = arith.mulf %80, %81 : vector<8x256xf32>
    %83 = vector.broadcast %60 : vector<1x256xf32> to vector<8x256xf32>
    %84 = arith.addf %82, %83 : vector<8x256xf32>
    %85 = arith.truncf %84 : vector<8x256xf32> to vector<8x256xbf16>
    %c0_38 = arith.constant 0 : index
    %c0_39 = arith.constant 0 : index
    %86 = vector.load %arg7[%c0_38, %c0_39] : memref<256x128xbf16, #tpu.memory_space<vmem>>, vector<256x128xbf16>
    %cst_40 = arith.constant dense<0.000000e+00> : vector<8x128xf32>
    %87 = tpu.matmul %85, %86, %cst_40 {dimension_numbers = #tpu.dot_dimension_numbers<[1], [0], [0], [1], [0, 0, 1, 1], [], []>} : vector<8x256xbf16>, vector<256x128xbf16>, vector<8x128xf32> -> vector<8x128xf32>
    %c3 = arith.constant 3 : index
    %c0_41 = arith.constant 0 : index
    %88 = vector.load %arg9[%c3, %c0_41] : memref<9x128xf32, #tpu.memory_space<vmem>>, vector<1x128xf32>
    %89 = vector.broadcast %88 : vector<1x128xf32> to vector<8x128xf32>
    %90 = arith.addf %87, %89 : vector<8x128xf32>
    %cst_42 = arith.constant 0.000000e+00 : f32
    %91 = vector.broadcast %cst_42 : f32 to vector<8x128xf32>
    %92 = arith.maximumf %90, %91 : vector<8x128xf32>
    %c4 = arith.constant 4 : index
    %c0_43 = arith.constant 0 : index
    %93 = vector.load %arg9[%c4, %c0_43] : memref<9x128xf32, #tpu.memory_space<vmem>>, vector<1x128xf32>
    %c5 = arith.constant 5 : index
    %c0_44 = arith.constant 0 : index
    %94 = vector.load %arg9[%c5, %c0_44] : memref<9x128xf32, #tpu.memory_space<vmem>>, vector<1x128xf32>
    %cst_45 = arith.constant dense<0.000000e+00> : vector<8xf32>
    %95 = vector.multi_reduction <add>, %92, %cst_45 [1] : vector<8x128xf32> to vector<8xf32>
    %96 = vector.shape_cast %95 : vector<8xf32> to vector<8x1xf32>
    %97 = arith.mulf %92, %92 : vector<8x128xf32>
    %cst_46 = arith.constant dense<0.000000e+00> : vector<8xf32>
    %98 = vector.multi_reduction <add>, %97, %cst_46 [1] : vector<8x128xf32> to vector<8xf32>
    %99 = vector.shape_cast %98 : vector<8xf32> to vector<8x1xf32>
    %cst_47 = arith.constant 7.812500e-03 : f32
    %100 = vector.broadcast %cst_47 : f32 to vector<8x1xf32>
    %101 = arith.mulf %96, %100 : vector<8x1xf32>
    %cst_48 = arith.constant 7.812500e-03 : f32
    %102 = vector.broadcast %cst_48 : f32 to vector<8x1xf32>
    %103 = arith.mulf %99, %102 : vector<8x1xf32>
    %104 = arith.mulf %101, %101 : vector<8x1xf32>
    %105 = arith.subf %103, %104 : vector<8x1xf32>
    %cst_49 = arith.constant 0.000000e+00 : f32
    %106 = vector.broadcast %cst_49 : f32 to vector<8x1xf32>
    %107 = arith.maximumf %105, %106 : vector<8x1xf32>
    %108 = vector.broadcast %101 : vector<8x1xf32> to vector<8x128xf32>
    %109 = arith.subf %92, %108 : vector<8x128xf32>
    %cst_50 = arith.constant 9.99999974E-6 : f32
    %110 = vector.broadcast %cst_50 : f32 to vector<8x1xf32>
    %111 = arith.addf %107, %110 : vector<8x1xf32>
    %112 = math.rsqrt %111 : vector<8x1xf32>
    %113 = vector.broadcast %112 : vector<8x1xf32> to vector<8x128xf32>
    %114 = arith.mulf %109, %113 : vector<8x128xf32>
    %115 = vector.broadcast %93 : vector<1x128xf32> to vector<8x128xf32>
    %116 = arith.mulf %114, %115 : vector<8x128xf32>
    %117 = vector.broadcast %94 : vector<1x128xf32> to vector<8x128xf32>
    %118 = arith.addf %116, %117 : vector<8x128xf32>
    %119 = arith.truncf %118 : vector<8x128xf32> to vector<8x128xbf16>
    %c0_51 = arith.constant 0 : index
    %c0_52 = arith.constant 0 : index
    %120 = vector.load %arg8[%c0_51, %c0_52] : memref<128x128xbf16, #tpu.memory_space<vmem>>, vector<128x128xbf16>
    %cst_53 = arith.constant dense<0.000000e+00> : vector<8x128xf32>
    %121 = tpu.matmul %119, %120, %cst_53 {dimension_numbers = #tpu.dot_dimension_numbers<[1], [0], [0], [1], [0, 0, 1, 1], [], []>} : vector<8x128xbf16>, vector<128x128xbf16>, vector<8x128xf32> -> vector<8x128xf32>
    %c6 = arith.constant 6 : index
    %c0_54 = arith.constant 0 : index
    %122 = vector.load %arg9[%c6, %c0_54] : memref<9x128xf32, #tpu.memory_space<vmem>>, vector<1x128xf32>
    %123 = vector.broadcast %122 : vector<1x128xf32> to vector<8x128xf32>
    %124 = arith.addf %121, %123 : vector<8x128xf32>
    %c7 = arith.constant 7 : index
    %c0_55 = arith.constant 0 : index
    %125 = vector.load %arg9[%c7, %c0_55] : memref<9x128xf32, #tpu.memory_space<vmem>>, vector<1x128xf32>
    %c8 = arith.constant 8 : index
    %c0_56 = arith.constant 0 : index
    %126 = vector.load %arg9[%c8, %c0_56] : memref<9x128xf32, #tpu.memory_space<vmem>>, vector<1x128xf32>
    %cst_57 = arith.constant dense<0.000000e+00> : vector<8xf32>
    %127 = vector.multi_reduction <add>, %124, %cst_57 [1] : vector<8x128xf32> to vector<8xf32>
    %128 = vector.shape_cast %127 : vector<8xf32> to vector<8x1xf32>
    %129 = arith.mulf %124, %124 : vector<8x128xf32>
    %cst_58 = arith.constant dense<0.000000e+00> : vector<8xf32>
    %130 = vector.multi_reduction <add>, %129, %cst_58 [1] : vector<8x128xf32> to vector<8xf32>
    %131 = vector.shape_cast %130 : vector<8xf32> to vector<8x1xf32>
    %cst_59 = arith.constant 7.812500e-03 : f32
    %132 = vector.broadcast %cst_59 : f32 to vector<8x1xf32>
    %133 = arith.mulf %128, %132 : vector<8x1xf32>
    %cst_60 = arith.constant 7.812500e-03 : f32
    %134 = vector.broadcast %cst_60 : f32 to vector<8x1xf32>
    %135 = arith.mulf %131, %134 : vector<8x1xf32>
    %136 = arith.mulf %133, %133 : vector<8x1xf32>
    %137 = arith.subf %135, %136 : vector<8x1xf32>
    %cst_61 = arith.constant 0.000000e+00 : f32
    %138 = vector.broadcast %cst_61 : f32 to vector<8x1xf32>
    %139 = arith.maximumf %137, %138 : vector<8x1xf32>
    %140 = vector.broadcast %133 : vector<8x1xf32> to vector<8x128xf32>
    %141 = arith.subf %124, %140 : vector<8x128xf32>
    %cst_62 = arith.constant 9.99999974E-6 : f32
    %142 = vector.broadcast %cst_62 : f32 to vector<8x1xf32>
    %143 = arith.addf %139, %142 : vector<8x1xf32>
    %144 = math.rsqrt %143 : vector<8x1xf32>
    %145 = vector.broadcast %144 : vector<8x1xf32> to vector<8x128xf32>
    %146 = arith.mulf %141, %145 : vector<8x128xf32>
    %147 = vector.broadcast %125 : vector<1x128xf32> to vector<8x128xf32>
    %148 = arith.mulf %146, %147 : vector<8x128xf32>
    %149 = vector.broadcast %126 : vector<1x128xf32> to vector<8x128xf32>
    %150 = arith.addf %148, %149 : vector<8x128xf32>
    %151 = arith.truncf %150 : vector<8x128xf32> to vector<8x128xbf16>
    %c0_63 = arith.constant 0 : index
    %c0_64 = arith.constant 0 : index
    %152 = vector.load %arg11[%c0_63, %c0_64] : memref<8x128xbf16, #tpu.memory_space<vmem>>, vector<8x128xbf16>
    tpu.vector_store %arg11[%c0_63, %c0_64], %151 {strides = array<i32>} : memref<8x128xbf16, #tpu.memory_space<vmem>>, vector<8x128xbf16>,
    return
  }
  func.func @transform_0(%arg0: i32) -> (i32, i32) {
    %c0_i32 = arith.constant 0 : i32
    %c0_i32_0 = arith.constant 0 : i32
    return %arg0, %c0_i32 : i32, i32
  }
  func.func @transform_1(%arg0: i32) -> (i32, i32) {
    %c0_i32 = arith.constant 0 : i32
    %c0_i32_0 = arith.constant 0 : i32
    return %arg0, %c0_i32 : i32, i32
  }
  func.func @transform_2(%arg0: i32) -> (i32, i32) {
    %c0_i32 = arith.constant 0 : i32
    %c0_i32_0 = arith.constant 0 : i32
    %c0_i32_1 = arith.constant 0 : i32
    return %c0_i32, %c0_i32_0 : i32, i32
  }
  func.func @transform_3(%arg0: i32) -> (i32, i32) {
    %c0_i32 = arith.constant 0 : i32
    %c0_i32_0 = arith.constant 0 : i32
    %c0_i32_1 = arith.constant 0 : i32
    return %c0_i32, %c0_i32_0 : i32, i32
  }
  func.func @transform_4(%arg0: i32) -> (i32, i32) {
    %c0_i32 = arith.constant 0 : i32
    %c0_i32_0 = arith.constant 0 : i32
    %c0_i32_1 = arith.constant 0 : i32
    return %c0_i32, %c0_i32_0 : i32, i32
  }
  func.func @transform_5(%arg0: i32) -> (i32, i32) {
    %c0_i32 = arith.constant 0 : i32
    %c0_i32_0 = arith.constant 0 : i32
    %c0_i32_1 = arith.constant 0 : i32
    return %c0_i32, %c0_i32_0 : i32, i32
  }
  func.func @transform_6(%arg0: i32) -> (i32, i32) {
    %c0_i32 = arith.constant 0 : i32
    %c0_i32_0 = arith.constant 0 : i32
    %c0_i32_1 = arith.constant 0 : i32
    return %c0_i32, %c0_i32_0 : i32, i32
  }
  func.func @transform_7(%arg0: i32) -> (i32, i32) {
    %c0_i32 = arith.constant 0 : i32
    %c0_i32_0 = arith.constant 0 : i32
    %c0_i32_1 = arith.constant 0 : i32
    return %c0_i32, %c0_i32_0 : i32, i32
  }
  func.func @transform_8(%arg0: i32) -> (i32, i32) {
    %c0_i32 = arith.constant 0 : i32
    %c0_i32_0 = arith.constant 0 : i32
    %c0_i32_1 = arith.constant 0 : i32
    return %c0_i32, %c0_i32_0 : i32, i32
  }
  func.func @transform_9(%arg0: i32) -> (i32, i32) {
    %c0_i32 = arith.constant 0 : i32
    %c0_i32_0 = arith.constant 0 : i32
    %c0_i32_1 = arith.constant 0 : i32
    return %c0_i32, %c0_i32_0 : i32, i32
  }
  func.func @transform_10(%arg0: i32) -> (i32, i32) {
    %c0_i32 = arith.constant 0 : i32
    %c0_i32_0 = arith.constant 0 : i32
    return %arg0, %c0_i32 : i32, i32
  }
}

</mosaic_0001>

<llo_original>
// kernel: tpu_custom_call.1
$region0: #{tpu_custom_call.1}
  #allocation0 [shape = 'u32[]', space=smem, size = 0x4, offset = 0x4, fixed_abs, tag = 'smem constant byte address 0x4 - core index']
  #allocation1 [shape = 'u32[72,128]{1,0:T(1,128)}', space=vmem, size = 0x9000, scoped, tag = 'internal scratch']
  %s0 = inlined_call_operand.hbm [shape: bf16[8,128], index: 0, kind: input, shape index: {}]
  %s1 = inlined_call_operand.vmem [shape: f32[8,2], index: 1, kind: input, shape index: {}]
  %s2 = inlined_call_operand.hbm [shape: f32[2,128], index: 2, kind: input, shape index: {}]
  %s3 = inlined_call_operand.vmem [shape: f32[1,128], index: 3, kind: input, shape index: {}]
  %s4 = inlined_call_operand.hbm [shape: bf16[128,128], index: 4, kind: input, shape index: {}]
  %s5 = inlined_call_operand.hbm [shape: bf16[256,256], index: 5, kind: input, shape index: {}]
  %s6 = inlined_call_operand.hbm [shape: bf16[256,128], index: 6, kind: input, shape index: {}]
  %s7 = inlined_call_operand.hbm [shape: bf16[128,128], index: 7, kind: input, shape index: {}]
  %s8 = inlined_call_operand.vmem [shape: f32[9,128], index: 8, kind: input, shape index: {}]
  %s9 = inlined_call_operand.hbm [shape: f32[3,256], index: 9, kind: input, shape index: {}]
  %s10 = inlined_call_operand.hbm [shape: bf16[8,128], index: 10, kind: output, shape index: {}]
  %s11 = sld [smem:[#allocation0]]
  $region78: #{tpu_custom_call.1} parent=0
    _
  %s13 = ssub.s32 1, %s11
  %s14 = scalar_select 0, %s13, %s11
  $region1: #{tpu_custom_call.1} parent=0
    #allocation2 [shape = 'u8[2048]{0}', space=vmem, size = 0x800, scoped, tag = 'input window, operand 0, single buffered']
    #allocation3 [shape = 's32[1]{0}', space=sflag, size = 0x4, scoped, tag = 'scoped memory for tpu_custom_call.1']
    #allocation4 [shape = 's32[1]{0}', space=sflag, size = 0x4, scoped, tag = 'scoped memory for tpu_custom_call.1']
    #allocation5 [shape = 'u8[1024]{0}', space=vmem, size = 0x400, scoped, tag = 'input window, operand 2, single buffered']
    #allocation6 [shape = 's32[1]{0}', space=sflag, size = 0x4, scoped, tag = 'scoped memory for tpu_custom_call.1']
    #allocation7 [shape = 'u8[32768]{0}', space=vmem, size = 0x8000, scoped, tag = 'input window, operand 4, single buffered']
    #allocation8 [shape = 'u8[131072]{0}', space=vmem, size = 0x20000, scoped, tag = 'input window, operand 5, single buffered']
    #allocation9 [shape = 's32[1]{0}', space=sflag, size = 0x4, scoped, tag = 'scoped memory for tpu_custom_call.1']
    #allocation10 [shape = 'u8[65536]{0}', space=vmem, size = 0x10000, scoped, tag = 'input window, operand 6, single buffered']
    #allocation11 [shape = 'u8[32768]{0}', space=vmem, size = 0x8000, scoped, tag = 'input window, operand 7, single buffered']
    #allocation12 [shape = 's32[1]{0}', space=sflag, size = 0x4, scoped, tag = 'scoped memory for tpu_custom_call.1']
    #allocation13 [shape = 'u8[4096]{0}', space=vmem, size = 0x1000, scoped, tag = 'input window, operand 9, single buffered']
    #allocation14 [shape = 'u8[2048]{0}', space=vmem, size = 0x800, scoped, tag = 'output window, operand 0, single buffered']
    %15 = vsyncpa [#allocation3], 0
    %16 = vsyncpa [#allocation6], 0
    %17 = vsyncpa [#allocation9], 0
    %18 = vsyncpa [#allocation12], 0
    %19 = vsyncpa [#allocation4], 0
    // Predicated region
    $region2: #{tpu_custom_call.1} parent=1 // pred_check
      _
    $region3: #{tpu_custom_call.1} parent=1 // pred_check_branch
      %21 = sbr.rel (0) target = $region5
    $region4: #{tpu_custom_call.1} parent=1 // pred_region
      %23 = vsyncadd [#allocation3], 0
      %s25 = sshll.u32 %s0, 4
      %s26 = int_to_ptr.hbm [resolvable:$true] %s25
      %s27 = sshll.u32 [#allocation2], 4
      %s28 = int_to_ptr.vmem [resolvable:$true] %s27
      %30 = dma.hbm_to_vmem [thread:$0]  %s26, 64, %s28, [#allocation3]
    $region5: #{tpu_custom_call.1} parent=1 // pred_fallthru
      _
    // Predicated region
    $region6: #{tpu_custom_call.1} parent=1 // pred_check
      _
    $region7: #{tpu_custom_call.1} parent=1 // pred_check_branch
      %32 = sbr.rel (0) target = $region9
    $region8: #{tpu_custom_call.1} parent=1 // pred_region
      _
    $region9: #{tpu_custom_call.1} parent=1 // pred_fallthru
      _
    // Predicated region
    $region10: #{tpu_custom_call.1} parent=1 // pred_check
      _
    $region11: #{tpu_custom_call.1} parent=1 // pred_check_branch
      %34 = sbr.rel (0) target = $region13
    $region12: #{tpu_custom_call.1} parent=1 // pred_region
      %36 = vsyncadd [#allocation6], 0
      %s38 = sshll.u32 %s2, 4
      %s39 = int_to_ptr.hbm [resolvable:$true] %s38
      %s40 = sshll.u32 [#allocation5], 4
      %s41 = int_to_ptr.vmem [resolvable:$true] %s40
      %43 = dma.hbm_to_vmem [thread:$0]  %s39, 32, %s41, [#allocation6]
    $region13: #{tpu_custom_call.1} parent=1 // pred_fallthru
      _
    // Predicated region
    $region14: #{tpu_custom_call.1} parent=1 // pred_check
      _
    $region15: #{tpu_custom_call.1} parent=1 // pred_check_branch
      %45 = sbr.rel (0) target = $region17
    $region16: #{tpu_custom_call.1} parent=1 // pred_region
      _
    $region17: #{tpu_custom_call.1} parent=1 // pred_fallthru
      _
    // Predicated region
    $region18: #{tpu_custom_call.1} parent=1 // pred_check
      _
    $region19: #{tpu_custom_call.1} parent=1 // pred_check_branch
      %47 = sbr.rel (0) target = $region21
    $region20: #{tpu_custom_call.1} parent=1 // pred_region
      %49 = vsyncadd [#allocation6], 0
      %s50 = sshll.u32 %s4, 4
      %s51 = int_to_ptr.hbm [resolvable:$true] %s50
      %s52 = sshll.u32 [#allocation7], 4
      %s53 = int_to_ptr.vmem [resolvable:$true] %s52
      %58 = dma.hbm_to_vmem [thread:$0]  %s51, 1024, %s53, [#allocation6], 64, 64, 4
    $region21: #{tpu_custom_call.1} parent=1 // pred_fallthru
      _
    // Predicated region
    $region22: #{tpu_custom_call.1} parent=1 // pred_check
      _
    $region23: #{tpu_custom_call.1} parent=1 // pred_check_branch
      %60 = sbr.rel (0) target = $region25
    $region24: #{tpu_custom_call.1} parent=1 // pred_region
      %62 = vsyncadd [#allocation9], 0
      %s63 = sshll.u32 %s5, 4
      %s64 = int_to_ptr.hbm [resolvable:$true] %s63
      %s65 = sshll.u32 [#allocation8], 4
      %s66 = int_to_ptr.vmem [resolvable:$true] %s65
      %71 = dma.hbm_to_vmem [thread:$0]  %s64, 4096, %s66, [#allocation9], 128, 128, 8
    $region25: #{tpu_custom_call.1} parent=1 // pred_fallthru
      _
    // Predicated region
    $region26: #{tpu_custom_call.1} parent=1 // pred_check
      _
    $region27: #{tpu_custom_call.1} parent=1 // pred_check_branch
      %73 = sbr.rel (0) target = $region29
    $region28: #{tpu_custom_call.1} parent=1 // pred_region
      %75 = vsyncadd [#allocation9], 0
      %s76 = sshll.u32 %s6, 4
      %s77 = int_to_ptr.hbm [resolvable:$true] %s76
      %s78 = sshll.u32 [#allocation10], 4
      %s79 = int_to_ptr.vmem [resolvable:$true] %s78
      %84 = dma.hbm_to_vmem [thread:$0]  %s77, 2048, %s79, [#allocation9], 64, 64, 4
    $region29: #{tpu_custom_call.1} parent=1 // pred_fallthru
      _
    // Predicated region
    $region30: #{tpu_custom_call.1} parent=1 // pred_check
      _
    $region31: #{tpu_custom_call.1} parent=1 // pred_check_branch
      %86 = sbr.rel (0) target = $region33
    $region32: #{tpu_custom_call.1} parent=1 // pred_region
      %88 = vsyncadd [#allocation12], 0
      %s89 = sshll.u32 %s7, 4
      %s90 = int_to_ptr.hbm [resolvable:$true] %s89
      %s91 = sshll.u32 [#allocation11], 4
      %s92 = int_to_ptr.vmem [resolvable:$true] %s91
      %97 = dma.hbm_to_vmem [thread:$0]  %s90, 1024, %s92, [#allocation12], 64, 64, 4
    $region33: #{tpu_custom_call.1} parent=1 // pred_fallthru
      _
    // Predicated region
    $region34: #{tpu_custom_call.1} parent=1 // pred_check
      _
    $region35: #{tpu_custom_call.1} parent=1 // pred_check_branch
      %99 = sbr.rel (0) target = $region37
    $region36: #{tpu_custom_call.1} parent=1 // pred_region
      _
    $region37: #{tpu_custom_call.1} parent=1 // pred_fallthru
      _
    // Predicated region
    $region38: #{tpu_custom_call.1} parent=1 // pred_check
      _
    $region39: #{tpu_custom_call.1} parent=1 // pred_check_branch
      %101 = sbr.rel (0) target = $region41
    $region40: #{tpu_custom_call.1} parent=1 // pred_region
      %103 = vsyncadd [#allocation12], 0
      %s105 = sshll.u32 %s9, 4
      %s106 = int_to_ptr.hbm [resolvable:$true] %s105
      %s107 = sshll.u32 [#allocation13], 4
      %s108 = int_to_ptr.vmem [resolvable:$true] %s107
      %110 = dma.hbm_to_vmem [thread:$0]  %s106, 128, %s108, [#allocation12]
    $region41: #{tpu_custom_call.1} parent=1 // pred_fallthru
      _
    // Predicated region
    $region42: #{tpu_custom_call.1} parent=1 // pred_check
      _
    $region43: #{tpu_custom_call.1} parent=1 // pred_check_branch
      %112 = sbr.rel (0) target = $region45
    $region44: #{tpu_custom_call.1} parent=1 // pred_region
      %114 = dma.done [#allocation3], 64
    $region45: #{tpu_custom_call.1} parent=1 // pred_fallthru
      _
    // Predicated region
    $region46: #{tpu_custom_call.1} parent=1 // pred_check
      _
    $region47: #{tpu_custom_call.1} parent=1 // pred_check_branch
      %116 = sbr.rel (0) target = $region49
    $region48: #{tpu_custom_call.1} parent=1 // pred_region
      %118 = dma.done [#allocation6], 32
    $region49: #{tpu_custom_call.1} parent=1 // pred_fallthru
      _
    // Predicated region
    $region50: #{tpu_custom_call.1} parent=1 // pred_check
      _
    $region51: #{tpu_custom_call.1} parent=1 // pred_check_branch
      %120 = sbr.rel (0) target = $region53
    $region52: #{tpu_custom_call.1} parent=1 // pred_region
      %122 = dma.done [#allocation6], 1024
    $region53: #{tpu_custom_call.1} parent=1 // pred_fallthru
      _
    // Predicated region
    $region54: #{tpu_custom_call.1} parent=1 // pred_check
      _
    $region55: #{tpu_custom_call.1} parent=1 // pred_check_branch
      %124 = sbr.rel (0) target = $region57
    $region56: #{tpu_custom_call.1} parent=1 // pred_region
      %126 = dma.done [#allocation9], 4096
    $region57: #{tpu_custom_call.1} parent=1 // pred_fallthru
      _
    // Predicated region
    $region58: #{tpu_custom_call.1} parent=1 // pred_check
      _
    $region59: #{tpu_custom_call.1} parent=1 // pred_check_branch
      %128 = sbr.rel (0) target = $region61
    $region60: #{tpu_custom_call.1} parent=1 // pred_region
      %130 = dma.done [#allocation9], 2048
    $region61: #{tpu_custom_call.1} parent=1 // pred_fallthru
      _
    // Predicated region
    $region62: #{tpu_custom_call.1} parent=1 // pred_check
      _
    $region63: #{tpu_custom_call.1} parent=1 // pred_check_branch
      %132 = sbr.rel (0) target = $region65
    $region64: #{tpu_custom_call.1} parent=1 // pred_region
      %134 = dma.done [#allocation12], 1024
    $region65: #{tpu_custom_call.1} parent=1 // pred_fallthru
      _
    // Predicated region
    $region66: #{tpu_custom_call.1} parent=1 // pred_check
      _
    $region67: #{tpu_custom_call.1} parent=1 // pred_check_branch
      %136 = sbr.rel (0) target = $region69
    $region68: #{tpu_custom_call.1} parent=1 // pred_region
      %138 = dma.done [#allocation12], 128
    $region69: #{tpu_custom_call.1} parent=1 // pred_fallthru
      _
    %v139 = vld [vmem:[%s1] sm:$0xff]
    %v140 = vld [vmem:[%s3] sm:$0x1]
    %v141 = vld [vmem:[#allocation5] sm:$0x1]
    %143 = vset.pattern.permute.xlu0 0
    %144 = vperm.xlu0 %143, %v139
    %v145 = vpop.permute.xlu0 %144
    %v147 = vperm.slane %v141, 0
    %v148 = vmul.f32 %v145, %v147
    %v150 = vperm.slane %v140, 0
    %v152 = vadd.f32 %v150, %v148
    %v153 = vld [vmem:[#allocation5 + $0x1] sm:$0x1]
    %154 = vset.pattern.permute.xlu0 1
    %155 = vperm.xlu0 %154, %v139
    %v156 = vpop.permute.xlu0 %155
    %v158 = vperm.slane %v153, 0
    %v159 = vmul.f32 %v156, %v158
    %v160 = vadd.f32 %v152, %v159
    %v161 = vmax.f32 %v160, 0.0
    %v162 = vpack.c.bf16 %v161, %v161
    %v163 = vld [vmem:[#allocation7] sm:$0xf]
    %v164 = vld [vmem:[#allocation7 + $0x4] sm:$0xf]
    %v165 = vld [vmem:[#allocation7 + $0x8] sm:$0xf]
    %v166 = vld [vmem:[#allocation7 + $0xc] sm:$0xf]
    %v167 = vld [vmem:[#allocation7 + $0x10] sm:$0xf]
    %v168 = vld [vmem:[#allocation7 + $0x14] sm:$0xf]
    %v169 = vld [vmem:[#allocation7 + $0x18] sm:$0xf]
    %v170 = vld [vmem:[#allocation7 + $0x1c] sm:$0xf]
    %v171 = vld [vmem:[#allocation7 + $0x20] sm:$0xf]
    %v172 = vld [vmem:[#allocation7 + $0x24] sm:$0xf]
    %v173 = vld [vmem:[#allocation7 + $0x28] sm:$0xf]
    %v174 = vld [vmem:[#allocation7 + $0x2c] sm:$0xf]
    %v175 = vld [vmem:[#allocation7 + $0x30] sm:$0xf]
    %v176 = vld [vmem:[#allocation7 + $0x34] sm:$0xf]
    %v177 = vld [vmem:[#allocation7 + $0x38] sm:$0xf]
    %v178 = vld [vmem:[#allocation7 + $0x3c] sm:$0xf]
    %v179 = vld [vmem:[%s8] sm:$0x1]
    %v180 = vperm.slane %v179, 0
    %v197 = vunpack.c.l.b16 %v163
    %v198 = vunpack.c.l.b16 %v164
    %v199 = vunpack.c.l.b16 %v165
    %v200 = vunpack.c.l.b16 %v166
    %v201 = vunpack.c.l.b16 %v167
    %v202 = vunpack.c.l.b16 %v168
    %v203 = vunpack.c.l.b16 %v169
    %v204 = vunpack.c.l.b16 %v170
    %v205 = vunpack.c.l.b16 %v171
    %v206 = vunpack.c.l.b16 %v172
    %v207 = vunpack.c.l.b16 %v173
    %v208 = vunpack.c.l.b16 %v174
    %v209 = vunpack.c.l.b16 %v175
    %v210 = vunpack.c.l.b16 %v176
    %v211 = vunpack.c.l.b16 %v177
    %v212 = vunpack.c.l.b16 %v178
    %v213 = vpack.c.b16 %v198, %v197
    %v214 = vpack.c.b16 %v200, %v199
    %v215 = vpack.c.b16 %v202, %v201
    %v216 = vpack.c.b16 %v204, %v203
    %v217 = vpack.c.b16 %v206, %v205
    %v218 = vpack.c.b16 %v208, %v207
    %v219 = vpack.c.b16 %v210, %v209
    %v220 = vpack.c.b16 %v212, %v211
    %229 = vmatpush.bf16.msra.mxu0 %v220
    %230 = vmatpush.bf16.msra.mxu0 %v219
    %231 = vmatpush.bf16.msra.mxu0 %v218
    %232 = vmatpush.bf16.msra.mxu0 %v217
    %233 = vmatpush.bf16.msra.mxu0 %v216
    %234 = vmatpush.bf16.msra.mxu0 %v215
    %235 = vmatpush.bf16.msra.mxu0 %v214
    %236 = vmatpush.bf16.msra.mxu0 %v213
    %237 = vmatmul.bf16.gmra.mxu0 %v162
    %v238 = vpop.f32.mrf.mxu0
    %v239 = vadd.f32 %v180, %v238
    %v240 = vpop.f32.mrf.mxu0
    %241 = vdwg.mxu0
    %v242 = vld [vmem:[%s8 + $0x1] sm:$0x1]
    %v243 = vld [vmem:[%s8 + $0x2] sm:$0x1]
    %244 = vadd.xlane.f32.xlu0 %v239
    %v245 = vpop.xlane.xlu0 %244
    %v246 = vmul.f32 %v239, %v239
    %247 = vadd.xlane.f32.xlu0 %v246
    %v248 = vpop.xlane.xlu0 %247
    %v249 = vmul.f32 %v245, 0.0078125
    %v250 = vmul.f32 %v248, 0.0078125
    %v251 = vmul.f32 %v249, %v249
    %v252 = vsub.f32 %v250, %v251
    %v253 = vmax.f32 %v252, 0.0
    %v254 = vsub.f32 %v239, %v249
    %v255 = vadd.f32 %v253, 1e-05
    %v256 = vrsqrt.pop %v255
    %v257 = vmul.f32 %v256, %v255
    %v258 = vmul.f32 %v257, %v256
    %v259 = vmul.f32 0.5, %v258
    %v260 = vsub.f32 1.5, %v259
    %v261 = vmul.f32 %v256, %v260
    %vm262 = vweird.f32 %v255
    %vm263 = vweird.f32 %v256
    %vm264 = vmor %vm262, %vm263
    %v265 = vsel %vm264, %v256, %v261
    %v266 = vmul.f32 %v254, %v265
    %v267 = vperm.slane %v242, 0
    %v268 = vmul.f32 %v266, %v267
    %v269 = vperm.slane %v243, 0
    %v270 = vadd.f32 %v268, %v269
    %v271 = vld [vmem:[#allocation2] sm:$0xf]
    %v272 = vpack.c.bf16 %v270, %v270
    %v273 = vld [vmem:[#allocation8] sm:$0xff]
    %v274 = vld [vmem:[#allocation8 + $0x8] sm:$0xff]
    %v275 = vld [vmem:[#allocation8 + $0x10] sm:$0xff]
    %v276 = vld [vmem:[#allocation8 + $0x18] sm:$0xff]
    %v277 = vld [vmem:[#allocation8 + $0x20] sm:$0xff]
    %v278 = vld [vmem:[#allocation8 + $0x28] sm:$0xff]
    %v279 = vld [vmem:[#allocation8 + $0x30] sm:$0xff]
    %v280 = vld [vmem:[#allocation8 + $0x38] sm:$0xff]
    %v281 = vld [vmem:[#allocation8 + $0x40] sm:$0xff]
    %v282 = vld [vmem:[#allocation8 + $0x48] sm:$0xff]
    %v283 = vld [vmem:[#allocation8 + $0x50] sm:$0xff]
    %v284 = vld [vmem:[#allocation8 + $0x58] sm:$0xff]
    %v285 = vld [vmem:[#allocation8 + $0x60] sm:$0xff]
    %v286 = vld [vmem:[#allocation8 + $0x68] sm:$0xff]
    %v287 = vld [vmem:[#allocation8 + $0x70] sm:$0xff]
    %v288 = vld [vmem:[#allocation8 + $0x78] sm:$0xff]
    %v289 = vld [vmem:[#allocation8 + $0x80] sm:$0xff]
    %v290 = vld [vmem:[#allocation8 + $0x88] sm:$0xff]
    %v291 = vld [vmem:[#allocation8 + $0x90] sm:$0xff]
    %v292 = vld [vmem:[#allocation8 + $0x98] sm:$0xff]
    %v293 = vld [vmem:[#allocation8 + $0xa0] sm:$0xff]
    %v294 = vld [vmem:[#allocation8 + $0xa8] sm:$0xff]
    %v295 = vld [vmem:[#allocation8 + $0xb0] sm:$0xff]
    %v296 = vld [vmem:[#allocation8 + $0xb8] sm:$0xff]
    %v297 = vld [vmem:[#allocation8 + $0xc0] sm:$0xff]
    %v298 = vld [vmem:[#allocation8 + $0xc8] sm:$0xff]
    %v299 = vld [vmem:[#allocation8 + $0xd0] sm:$0xff]
    %v300 = vld [vmem:[#allocation8 + $0xd8] sm:$0xff]
    %v301 = vld [vmem:[#allocation8 + $0xe0] sm:$0xff]
    %v302 = vld [vmem:[#allocation8 + $0xe8] sm:$0xff]
    %v303 = vld [vmem:[#allocation8 + $0xf0] sm:$0xff]
    %v304 = vld [vmem:[#allocation8 + $0xf8] sm:$0xff]
    %v305 = vld [vmem:[#allocation13] ss:$4 sm:$0x3]
    %v307 = vperm.slane %v305, 0
    %v308 = vperm.slane %v305, 1
    %v343 = vunpack.c.l.b16 %v273
    %v344 = vunpack.c.h.b16 %v273
    %v345 = vunpack.c.l.b16 %v274
    %v346 = vunpack.c.h.b16 %v274
    %v347 = vunpack.c.l.b16 %v275
    %v348 = vunpack.c.h.b16 %v275
    %v349 = vunpack.c.l.b16 %v276
    %v350 = vunpack.c.h.b16 %v276
    %v351 = vunpack.c.l.b16 %v277
    %v352 = vunpack.c.h.b16 %v277
    %v353 = vunpack.c.l.b16 %v278
    %v354 = vunpack.c.h.b16 %v278
    %v355 = vunpack.c.l.b16 %v279
    %v356 = vunpack.c.h.b16 %v279
    %v357 = vunpack.c.l.b16 %v280
    %v358 = vunpack.c.h.b16 %v280
    %v359 = vunpack.c.l.b16 %v281
    %v360 = vunpack.c.h.b16 %v281
    %v361 = vunpack.c.l.b16 %v282
    %v362 = vunpack.c.h.b16 %v282
    %v363 = vunpack.c.l.b16 %v283
    %v364 = vunpack.c.h.b16 %v283
    %v365 = vunpack.c.l.b16 %v284
    %v366 = vunpack.c.h.b16 %v284
    %v367 = vunpack.c.l.b16 %v285
    %v368 = vunpack.c.h.b16 %v285
    %v369 = vunpack.c.l.b16 %v286
    %v370 = vunpack.c.h.b16 %v286
    %v371 = vunpack.c.l.b16 %v287
    %v372 = vunpack.c.h.b16 %v287
    %v373 = vunpack.c.l.b16 %v288
    %v374 = vunpack.c.h.b16 %v288
    %v375 = vunpack.c.l.b16 %v289
    %v376 = vunpack.c.h.b16 %v289
    %v377 = vunpack.c.l.b16 %v290
    %v378 = vunpack.c.h.b16 %v290
    %v379 = vunpack.c.l.b16 %v291
    %v380 = vunpack.c.h.b16 %v291
    %v381 = vunpack.c.l.b16 %v292
    %v382 = vunpack.c.h.b16 %v292
    %v383 = vunpack.c.l.b16 %v293
    %v384 = vunpack.c.h.b16 %v293
    %v385 = vunpack.c.l.b16 %v294
    %v386 = vunpack.c.h.b16 %v294
    %v387 = vunpack.c.l.b16 %v295
    %v388 = vunpack.c.h.b16 %v295
    %v389 = vunpack.c.l.b16 %v296
    %v390 = vunpack.c.h.b16 %v296
    %v391 = vunpack.c.l.b16 %v297
    %v392 = vunpack.c.h.b16 %v297
    %v393 = vunpack.c.l.b16 %v298
    %v394 = vunpack.c.h.b16 %v298
    %v395 = vunpack.c.l.b16 %v299
    %v396 = vunpack.c.h.b16 %v299
    %v397 = vunpack.c.l.b16 %v300
    %v398 = vunpack.c.h.b16 %v300
    %v399 = vunpack.c.l.b16 %v301
    %v400 = vunpack.c.h.b16 %v301
    %v401 = vunpack.c.l.b16 %v302
    %v402 = vunpack.c.h.b16 %v302
    %v403 = vunpack.c.l.b16 %v303
    %v404 = vunpack.c.h.b16 %v303
    %v405 = vunpack.c.l.b16 %v304
    %v406 = vunpack.c.h.b16 %v304
    %v407 = vpack.c.b16 %v345, %v343
    %v408 = vpack.c.b16 %v346, %v344
    %v409 = vpack.c.b16 %v349, %v347
    %v410 = vpack.c.b16 %v350, %v348
    %v411 = vpack.c.b16 %v353, %v351
    %v412 = vpack.c.b16 %v354, %v352
    %v413 = vpack.c.b16 %v357, %v355
    %v414 = vpack.c.b16 %v358, %v356
    %v415 = vpack.c.b16 %v361, %v359
    %v416 = vpack.c.b16 %v362, %v360
    %v417 = vpack.c.b16 %v365, %v363
    %v418 = vpack.c.b16 %v366, %v364
    %v419 = vpack.c.b16 %v369, %v367
    %v420 = vpack.c.b16 %v370, %v368
    %v421 = vpack.c.b16 %v373, %v371
    %v422 = vpack.c.b16 %v374, %v372
    %v423 = vpack.c.b16 %v377, %v375
    %v424 = vpack.c.b16 %v378, %v376
    %v425 = vpack.c.b16 %v381, %v379
    %v426 = vpack.c.b16 %v382, %v380
    %v427 = vpack.c.b16 %v385, %v383
    %v428 = vpack.c.b16 %v386, %v384
    %v429 = vpack.c.b16 %v389, %v387
    %v430 = vpack.c.b16 %v390, %v388
    %v431 = vpack.c.b16 %v393, %v391
    %v432 = vpack.c.b16 %v394, %v392
    %v433 = vpack.c.b16 %v397, %v395
    %v434 = vpack.c.b16 %v398, %v396
    %v435 = vpack.c.b16 %v401, %v399
    %v436 = vpack.c.b16 %v402, %v400
    %v437 = vpack.c.b16 %v405, %v403
    %v438 = vpack.c.b16 %v406, %v404
    %471 = vmatpush.bf16.msra.mxu0 %v421
    %472 = vmatpush.bf16.msra.mxu0 %v419
    %473 = vmatpush.bf16.msra.mxu0 %v417
    %474 = vmatpush.bf16.msra.mxu0 %v415
    %475 = vmatpush.bf16.msra.mxu0 %v413
    %476 = vmatpush.bf16.msra.mxu0 %v411
    %477 = vmatpush.bf16.msra.mxu0 %v409
    %478 = vmatpush.bf16.msra.mxu0 %v407
    %479 = vmatmul.bf16.gmra.mxu0 %v271
    %v480 = vpop.f32.mrf.mxu0
    %v481 = vadd.f32 %v307, %v480
    %v482 = vpop.f32.mrf.mxu0
    %483 = vdwg.mxu0
    %484 = vmatpush.bf16.msra.mxu0 %v437
    %485 = vmatpush.bf16.msra.mxu0 %v435
    %486 = vmatpush.bf16.msra.mxu0 %v433
    %487 = vmatpush.bf16.msra.mxu0 %v431
    %488 = vmatpush.bf16.msra.mxu0 %v429
    %489 = vmatpush.bf16.msra.mxu0 %v427
    %490 = vmatpush.bf16.msra.mxu0 %v425
    %491 = vmatpush.bf16.msra.mxu0 %v423
    %492 = vmatmul.bf16.gmra.mxu0 %v272
    %v493 = vpop.f32.mrf.mxu0
    %v494 = vadd.f32 %v481, %v493
    %v495 = vpop.f32.mrf.mxu0
    %496 = vdwg.mxu0
    %497 = vmatpush.bf16.msra.mxu0 %v422
    %498 = vmatpush.bf16.msra.mxu0 %v420
    %499 = vmatpush.bf16.msra.mxu0 %v418
    %500 = vmatpush.bf16.msra.mxu0 %v416
    %501 = vmatpush.bf16.msra.mxu0 %v414
    %502 = vmatpush.bf16.msra.mxu0 %v412
    %503 = vmatpush.bf16.msra.mxu0 %v410
    %504 = vmatpush.bf16.msra.mxu0 %v408
    %505 = vmatmul.bf16.gmra.mxu0 %v271
    %v506 = vpop.f32.mrf.mxu0
    %v507 = vadd.f32 %v308, %v506
    %v508 = vpop.f32.mrf.mxu0
    %509 = vdwg.mxu0
    %510 = vmatpush.bf16.msra.mxu0 %v438
    %511 = vmatpush.bf16.msra.mxu0 %v436
    %512 = vmatpush.bf16.msra.mxu0 %v434
    %513 = vmatpush.bf16.msra.mxu0 %v432
    %514 = vmatpush.bf16.msra.mxu0 %v430
    %515 = vmatpush.bf16.msra.mxu0 %v428
    %516 = vmatpush.bf16.msra.mxu0 %v426
    %517 = vmatpush.bf16.msra.mxu0 %v424
    %518 = vmatmul.bf16.gmra.mxu0 %v272
    %v519 = vpop.f32.mrf.mxu0
    %v520 = vadd.f32 %v507, %v519
    %v521 = vpop.f32.mrf.mxu0
    %522 = vdwg.mxu0
    %v523 = vmax.f32 %v494, 0.0
    %v524 = vmax.f32 %v520, 0.0
    %s525 = scalar_lea.vmem [#allocation13], 1
    %v526 = vld [vmem:[%s525] ss:$4 sm:$0x3]
    %s527 = scalar_lea.vmem [#allocation13], 2
    %v528 = vld [vmem:[%s527] ss:$4 sm:$0x3]
    %v529 = vadd.f32 %v523, %v524
    %530 = vadd.xlane.f32.xlu0 %v529
    %v531 = vpop.xlane.xlu0 %530
    %v532 = vmul.f32 %v523, %v523
    %v533 = vmul.f32 %v524, %v524
    %v534 = vadd.f32 %v532, %v533
    %535 = vadd.xlane.f32.xlu0 %v534
    %v536 = vpop.xlane.xlu0 %535
    %v537 = vmul.f32 %v531, 0.00390625
    %v538 = vmul.f32 %v536, 0.00390625
    %v539 = vmul.f32 %v537, %v537
    %v540 = vsub.f32 %v538, %v539
    %v541 = vmax.f32 %v540, 0.0
    %v542 = vsub.f32 %v523, %v537
    %v543 = vsub.f32 %v524, %v537
    %v544 = vadd.f32 %v541, 1e-05
    %v545 = vrsqrt.pop %v544
    %v546 = vmul.f32 %v545, %v544
    %v547 = vmul.f32 %v546, %v545
    %v548 = vmul.f32 0.5, %v547
    %v549 = vsub.f32 1.5, %v548
    %v550 = vmul.f32 %v545, %v549
    %vm551 = vweird.f32 %v544
    %vm552 = vweird.f32 %v545
    %vm553 = vmor %vm551, %vm552
    %v554 = vsel %vm553, %v545, %v550
    %v555 = vmul.f32 %v542, %v554
    %v556 = vmul.f32 %v543, %v554
    %v558 = vperm.slane %v526, 0
    %v559 = vperm.slane %v526, 1
    %v562 = vmul.f32 %v555, %v558
    %v563 = vmul.f32 %v556, %v559
    %v565 = vperm.slane %v528, 0
    %v566 = vperm.slane %v528, 1
    %v569 = vadd.f32 %v562, %v565
    %v570 = vadd.f32 %v563, %v566
    %v571 = vpack.c.bf16 %v569, %v569
    %v572 = vpack.c.bf16 %v570, %v570
    %v573 = vld [vmem:[#allocation10] sm:$0xf]
    %v574 = vld [vmem:[#allocation10 + $0x4] sm:$0xf]
    %v575 = vld [vmem:[#allocation10 + $0x8] sm:$0xf]
    %v576 = vld [vmem:[#allocation10 + $0xc] sm:$0xf]
    %v577 = vld [vmem:[#allocation10 + $0x10] sm:$0xf]
    %v578 = vld [vmem:[#allocation10 + $0x14] sm:$0xf]
    %v579 = vld [vmem:[#allocation10 + $0x18] sm:$0xf]
    %v580 = vld [vmem:[#allocation10 + $0x1c] sm:$0xf]
    %v581 = vld [vmem:[#allocation10 + $0x20] sm:$0xf]
    %v582 = vld [vmem:[#allocation10 + $0x24] sm:$0xf]
    %v583 = vld [vmem:[#allocation10 + $0x28] sm:$0xf]
    %v584 = vld [vmem:[#allocation10 + $0x2c] sm:$0xf]
    %v585 = vld [vmem:[#allocation10 + $0x30] sm:$0xf]
    %v586 = vld [vmem:[#allocation10 + $0x34] sm:$0xf]
    %v587 = vld [vmem:[#allocation10 + $0x38] sm:$0xf]
    %v588 = vld [vmem:[#allocation10 + $0x3c] sm:$0xf]
    %v589 = vld [vmem:[#allocation10 + $0x40] sm:$0xf]
    %v590 = vld [vmem:[#allocation10 + $0x44] sm:$0xf]
    %v591 = vld [vmem:[#allocation10 + $0x48] sm:$0xf]
    %v592 = vld [vmem:[#allocation10 + $0x4c] sm:$0xf]
    %v593 = vld [vmem:[#allocation10 + $0x50] sm:$0xf]
    %v594 = vld [vmem:[#allocation10 + $0x54] sm:$0xf]
    %v595 = vld [vmem:[#allocation10 + $0x58] sm:$0xf]
    %v596 = vld [vmem:[#allocation10 + $0x5c] sm:$0xf]
    %v597 = vld [vmem:[#allocation10 + $0x60] sm:$0xf]
    %v598 = vld [vmem:[#allocation10 + $0x64] sm:$0xf]
    %v599 = vld [vmem:[#allocation10 + $0x68] sm:$0xf]
    %v600 = vld [vmem:[#allocation10 + $0x6c] sm:$0xf]
    %v601 = vld [vmem:[#allocation10 + $0x70] sm:$0xf]
    %v602 = vld [vmem:[#allocation10 + $0x74] sm:$0xf]
    %v603 = vld [vmem:[#allocation10 + $0x78] sm:$0xf]
    %v604 = vld [vmem:[#allocation10 + $0x7c] sm:$0xf]
    %v605 = vld [vmem:[%s8 + $0x3] sm:$0x1]
    %v606 = vperm.slane %v605, 0
    %v639 = vunpack.c.l.b16 %v573
    %v640 = vunpack.c.l.b16 %v574
    %v641 = vunpack.c.l.b16 %v575
    %v642 = vunpack.c.l.b16 %v576
    %v643 = vunpack.c.l.b16 %v577
    %v644 = vunpack.c.l.b16 %v578
    %v645 = vunpack.c.l.b16 %v579
    %v646 = vunpack.c.l.b16 %v580
    %v647 = vunpack.c.l.b16 %v581
    %v648 = vunpack.c.l.b16 %v582
    %v649 = vunpack.c.l.b16 %v583
    %v650 = vunpack.c.l.b16 %v584
    %v651 = vunpack.c.l.b16 %v585
    %v652 = vunpack.c.l.b16 %v586
    %v653 = vunpack.c.l.b16 %v587
    %v654 = vunpack.c.l.b16 %v588
    %v655 = vunpack.c.l.b16 %v589
    %v656 = vunpack.c.l.b16 %v590
    %v657 = vunpack.c.l.b16 %v591
    %v658 = vunpack.c.l.b16 %v592
    %v659 = vunpack.c.l.b16 %v593
    %v660 = vunpack.c.l.b16 %v594
    %v661 = vunpack.c.l.b16 %v595
    %v662 = vunpack.c.l.b16 %v596
    %v663 = vunpack.c.l.b16 %v597
    %v664 = vunpack.c.l.b16 %v598
    %v665 = vunpack.c.l.b16 %v599
    %v666 = vunpack.c.l.b16 %v600
    %v667 = vunpack.c.l.b16 %v601
    %v668 = vunpack.c.l.b16 %v602
    %v669 = vunpack.c.l.b16 %v603
    %v670 = vunpack.c.l.b16 %v604
    %v671 = vpack.c.b16 %v640, %v639
    %v672 = vpack.c.b16 %v642, %v641
    %v673 = vpack.c.b16 %v644, %v643
    %v674 = vpack.c.b16 %v646, %v645
    %v675 = vpack.c.b16 %v648, %v647
    %v676 = vpack.c.b16 %v650, %v649
    %v677 = vpack.c.b16 %v652, %v651
    %v678 = vpack.c.b16 %v654, %v653
    %v679 = vpack.c.b16 %v656, %v655
    %v680 = vpack.c.b16 %v658, %v657
    %v681 = vpack.c.b16 %v660, %v659
    %v682 = vpack.c.b16 %v662, %v661
    %v683 = vpack.c.b16 %v664, %v663
    %v684 = vpack.c.b16 %v666, %v665
    %v685 = vpack.c.b16 %v668, %v667
    %v686 = vpack.c.b16 %v670, %v669
    %703 = vmatpush.bf16.msra.mxu0 %v678
    %704 = vmatpush.bf16.msra.mxu0 %v677
    %705 = vmatpush.bf16.msra.mxu0 %v676
    %706 = vmatpush.bf16.msra.mxu0 %v675
    %707 = vmatpush.bf16.msra.mxu0 %v674
    %708 = vmatpush.bf16.msra.mxu0 %v673
    %709 = vmatpush.bf16.msra.mxu0 %v672
    %710 = vmatpush.bf16.msra.mxu0 %v671
    %711 = vmatmul.bf16.gmra.mxu0 %v571
    %v712 = vpop.f32.mrf.mxu0
    %v713 = vadd.f32 %v606, %v712
    %v714 = vpop.f32.mrf.mxu0
    %715 = vdwg.mxu0
    %716 = vmatpush.bf16.msra.mxu0 %v686
    %717 = vmatpush.bf16.msra.mxu0 %v685
    %718 = vmatpush.bf16.msra.mxu0 %v684
    %719 = vmatpush.bf16.msra.mxu0 %v683
    %720 = vmatpush.bf16.msra.mxu0 %v682
    %721 = vmatpush.bf16.msra.mxu0 %v681
    %722 = vmatpush.bf16.msra.mxu0 %v680
    %723 = vmatpush.bf16.msra.mxu0 %v679
    %724 = vmatmul.bf16.gmra.mxu0 %v572
    %v725 = vpop.f32.mrf.mxu0
    %v726 = vadd.f32 %v713, %v725
    %v727 = vpop.f32.mrf.mxu0
    %728 = vdwg.mxu0
    %v729 = vmax.f32 %v726, 0.0
    %v730 = vld [vmem:[%s8 + $0x4] sm:$0x1]
    %v731 = vld [vmem:[%s8 + $0x5] sm:$0x1]
    %732 = vadd.xlane.f32.xlu0 %v729
    %v733 = vpop.xlane.xlu0 %732
    %v734 = vmul.f32 %v729, %v729
    %735 = vadd.xlane.f32.xlu0 %v734
    %v736 = vpop.xlane.xlu0 %735
    %v737 = vmul.f32 %v733, 0.0078125
    %v738 = vmul.f32 %v736, 0.0078125
    %v739 = vmul.f32 %v737, %v737
    %v740 = vsub.f32 %v738, %v739
    %v741 = vmax.f32 %v740, 0.0
    %v742 = vsub.f32 %v729, %v737
    %v743 = vadd.f32 %v741, 1e-05
    %v744 = vrsqrt.pop %v743
    %v745 = vmul.f32 %v744, %v743
    %v746 = vmul.f32 %v745, %v744
    %v747 = vmul.f32 0.5, %v746
    %v748 = vsub.f32 1.5, %v747
    %v749 = vmul.f32 %v744, %v748
    %vm750 = vweird.f32 %v743
    %vm751 = vweird.f32 %v744
    %vm752 = vmor %vm750, %vm751
    %v753 = vsel %vm752, %v744, %v749
    %v754 = vmul.f32 %v742, %v753
    %v755 = vperm.slane %v730, 0
    %v756 = vmul.f32 %v754, %v755
    %v757 = vperm.slane %v731, 0
    %v758 = vadd.f32 %v756, %v757
    %v759 = vpack.c.bf16 %v758, %v758
    %v760 = vld [vmem:[#allocation11] sm:$0xf]
    %v761 = vld [vmem:[#allocation11 + $0x4] sm:$0xf]
    %v762 = vld [vmem:[#allocation11 + $0x8] sm:$0xf]
    %v763 = vld [vmem:[#allocation11 + $0xc] sm:$0xf]
    %v764 = vld [vmem:[#allocation11 + $0x10] sm:$0xf]
    %v765 = vld [vmem:[#allocation11 + $0x14] sm:$0xf]
    %v766 = vld [vmem:[#allocation11 + $0x18] sm:$0xf]
    %v767 = vld [vmem:[#allocation11 + $0x1c] sm:$0xf]
    %v768 = vld [vmem:[#allocation11 + $0x20] sm:$0xf]
    %v769 = vld [vmem:[#allocation11 + $0x24] sm:$0xf]
    %v770 = vld [vmem:[#allocation11 + $0x28] sm:$0xf]
    %v771 = vld [vmem:[#allocation11 + $0x2c] sm:$0xf]
    %v772 = vld [vmem:[#allocation11 + $0x30] sm:$0xf]
    %v773 = vld [vmem:[#allocation11 + $0x34] sm:$0xf]
    %v774 = vld [vmem:[#allocation11 + $0x38] sm:$0xf]
    %v775 = vld [vmem:[#allocation11 + $0x3c] sm:$0xf]
    %v776 = vld [vmem:[%s8 + $0x6] sm:$0x1]
    %v777 = vperm.slane %v776, 0
    %v794 = vunpack.c.l.b16 %v760
    %v795 = vunpack.c.l.b16 %v761
    %v796 = vunpack.c.l.b16 %v762
    %v797 = vunpack.c.l.b16 %v763
    %v798 = vunpack.c.l.b16 %v764
    %v799 = vunpack.c.l.b16 %v765
    %v800 = vunpack.c.l.b16 %v766
    %v801 = vunpack.c.l.b16 %v767
    %v802 = vunpack.c.l.b16 %v768
    %v803 = vunpack.c.l.b16 %v769
    %v804 = vunpack.c.l.b16 %v770
    %v805 = vunpack.c.l.b16 %v771
    %v806 = vunpack.c.l.b16 %v772
    %v807 = vunpack.c.l.b16 %v773
    %v808 = vunpack.c.l.b16 %v774
    %v809 = vunpack.c.l.b16 %v775
    %v810 = vpack.c.b16 %v795, %v794
    %v811 = vpack.c.b16 %v797, %v796
    %v812 = vpack.c.b16 %v799, %v798
    %v813 = vpack.c.b16 %v801, %v800
    %v814 = vpack.c.b16 %v803, %v802
    %v815 = vpack.c.b16 %v805, %v804
    %v816 = vpack.c.b16 %v807, %v806
    %v817 = vpack.c.b16 %v809, %v808
    %826 = vmatpush.bf16.msra.mxu0 %v817
    %827 = vmatpush.bf16.msra.mxu0 %v816
    %828 = vmatpush.bf16.msra.mxu0 %v815
    %829 = vmatpush.bf16.msra.mxu0 %v814
    %830 = vmatpush.bf16.msra.mxu0 %v813
    %831 = vmatpush.bf16.msra.mxu0 %v812
    %832 = vmatpush.bf16.msra.mxu0 %v811
    %833 = vmatpush.bf16.msra.mxu0 %v810
    %834 = vmatmul.bf16.gmra.mxu0 %v759
    %v835 = vpop.f32.mrf.mxu0
    %v836 = vadd.f32 %v777, %v835
    %v837 = vpop.f32.mrf.mxu0
    %838 = vdwg.mxu0
    %v839 = vld [vmem:[%s8 + $0x7] sm:$0x1]
    %v840 = vld [vmem:[%s8 + $0x8] sm:$0x1]
    %841 = vadd.xlane.f32.xlu0 %v836
    %v842 = vpop.xlane.xlu0 %841
    %v843 = vmul.f32 %v836, %v836
    %844 = vadd.xlane.f32.xlu0 %v843
    %v845 = vpop.xlane.xlu0 %844
    %v846 = vmul.f32 %v842, 0.0078125
    %v847 = vmul.f32 %v845, 0.0078125
    %v848 = vmul.f32 %v846, %v846
    %v849 = vsub.f32 %v847, %v848
    %v850 = vmax.f32 %v849, 0.0
    %v851 = vsub.f32 %v836, %v846
    %v852 = vadd.f32 %v850, 1e-05
    %v853 = vrsqrt.pop %v852
    %v854 = vmul.f32 %v853, %v852
    %v855 = vmul.f32 %v854, %v853
    %v856 = vmul.f32 0.5, %v855
    %v857 = vsub.f32 1.5, %v856
    %v858 = vmul.f32 %v853, %v857
    %vm859 = vweird.f32 %v852
    %vm860 = vweird.f32 %v853
    %vm861 = vmor %vm859, %vm860
    %v862 = vsel %vm861, %v853, %v858
    %v863 = vmul.f32 %v851, %v862
    %v864 = vperm.slane %v839, 0
    %v865 = vmul.f32 %v863, %v864
    %v866 = vperm.slane %v840, 0
    %v867 = vadd.f32 %v865, %v866
    %v868 = vpack.c.bf16 %v867, %v867
    %869 = vst [vmem:[#allocation14] sm:$0xf] %v868
    // Predicated region
    $region70: #{tpu_custom_call.1} parent=1 // pred_check
      _
    $region71: #{tpu_custom_call.1} parent=1 // pred_check_branch
      %871 = sbr.rel (0) target = $region73
    $region72: #{tpu_custom_call.1} parent=1 // pred_region
      %873 = vsyncadd [#allocation4], 0
      %s875 = sshll.u32 [#allocation14], 4
      %s876 = int_to_ptr.vmem [resolvable:$true] %s875
      %s877 = sshll.u32 %s10, 4
      %s878 = int_to_ptr.hbm [resolvable:$true] %s877
      %880 = dma.vmem_to_hbm [thread:$0]  %s876, 64, %s878, [#allocation4]
    $region73: #{tpu_custom_call.1} parent=1 // pred_fallthru
      _
    // Predicated region
    $region74: #{tpu_custom_call.1} parent=1 // pred_check
      _
    $region75: #{tpu_custom_call.1} parent=1 // pred_check_branch
      %882 = sbr.rel (0) target = $region77
    $region76: #{tpu_custom_call.1} parent=1 // pred_region
      %884 = dma.done [#allocation4], 64
    $region77: #{tpu_custom_call.1} parent=1 // pred_fallthru
      _
    %885 = vsyncpa [#allocation3], 1
    %886 = vsyncpa [#allocation6], 1
    %887 = vsyncpa [#allocation9], 1
    %888 = vsyncpa [#allocation12], 1
    %889 = vsyncpa [#allocation4], 1

</llo_original>
